<compile_context>
chip_gen: v7x
topology: tpu7x:2x2x1
jax: 0.10.0
libtpu: 0.0.40
codegen_flags: <defaults>
</compile_context>

<pallas_src>
import jax
import jax.numpy as jnp
from jax.experimental import pallas as pl
from jax.experimental.pallas import tpu as pltpu


# ----------------------------------------------------------------------------
# Model constants (mirrors module __init__ for the config above)
# ----------------------------------------------------------------------------
IN_C, IN_H, IN_W = 1, 4, 64          # DataDimensions
CH = 4                               # 2 ** channel_exp_base
FIRST_OUT_W = 16                     # width after first conv (stride 4)
RES_OUT_W = 4                        # width after residual block (stride 4)
FC_REPR_DIM = 32
FC_IN = CH * RES_OUT_W               # no_out_channels * data_size_after_conv = 16
X_FLAT = IN_C * IN_H * IN_W          # 256
NF1 = FIRST_OUT_W * CH               # 64 features after first block
NF1_PAD = 128                        # padded to 128 for an aligned transpose


# ----------------------------------------------------------------------------
# Pallas kernel: whole CNNModel forward, feature-major after the first GEMM
# ----------------------------------------------------------------------------
def _swish(x):
    # Swish = x * sigmoid(x) = 0.5 * x * (tanh(0.5 * x) + 1)  -> single EUP push.
    return 0.5 * x * (jnp.tanh(0.5 * x) + 1.0)


def _fused_cnn_kernel(x_ref, w1_ref, s1_ref, b1_ref, wih_ref, sh2_ref,
                      wc2_ref, bz_ref, wfc_ref, o_ref):
    x = x_ref[...]                                                   # (TB, 256)

    # FirstCNNBlock: conv (4,4)/stride(4,4), pad 0, as GEMM (output cols 64..127
    # are zero padding so the transpose is fully (8,128)-aligned).
    a = jnp.dot(x, w1_ref[...], preferred_element_type=jnp.float32)  # (TB, 128)
    a_t = a.T[:NF1, :]                                               # (64, TB)
    a_t = _swish(a_t)

    # CNNResidualBlock (full_preact=True): pre = Swish(BN1(a))
    pre = _swish(a_t * s1_ref[...] + b1_ref[...])                    # (64, TB)

    # one GEMM for [downsample-identity (fc-BN scale folded) ; conv_1 (BN2 scale
    # folded)], then split with static sublane slices.
    ih = jnp.dot(wih_ref[...], pre, preferred_element_type=jnp.float32)  # (32, TB)
    ident = ih[:FC_IN, :]                                            # (16, TB)
    h = _swish(ih[FC_IN:, :] + sh2_ref[...])    # BN2 shift + Swish; Dropout2d=id

    # conv_2 (1,3)/stride 1/pad 1 (fc-BN scale folded) + residual add + merged
    # bias (fc-BN shift + scaled downsample bias); StochasticDepth = id (eval).
    z = jnp.dot(wc2_ref[...], h, preferred_element_type=jnp.float32)
    feat = _swish(z + ident + bz_ref[...])                           # (16, TB)

    # fc linear (16 -> 32, no bias) -> lane-dense (32, TB) output slab.
    o_ref[...] = jnp.dot(wfc_ref[...], feat, preferred_element_type=jnp.float32)


# ----------------------------------------------------------------------------
# Wrapper: fold convs / BNs / flatten-permutation into GEMM operands (done once)
# ----------------------------------------------------------------------------
def _prepare_operands(params):
    f32 = jnp.float32
    eps = 1e-5

    def bn_fold(bn):
        gamma, beta, rmean, rvar = bn
        scale = gamma / jnp.sqrt(rvar + eps)
        return scale, beta - rmean * scale

    # --- FirstCNNBlock conv: x_flat[b, h*64 + ow*4 + kw] -> a[b, ow*4 + co] ---
    # (C_in == 1) block-diagonal over the 16 output positions; zero-padded to 128
    # output columns so the in-kernel transpose is tile-aligned.
    wd = params["w_first"][:, 0].transpose(1, 2, 0)                    # (kh, kw, co)
    w1 = jnp.einsum("hwc,oq->howqc", wd,
                    jnp.eye(FIRST_OUT_W, dtype=f32)).reshape(X_FLAT, NF1)
    w1p = jnp.zeros((X_FLAT, NF1_PAD), f32).at[:, :NF1].set(w1)

    # BN1 sits inside a Swish -> cannot be folded into weights; position-major.
    s1, b1 = bn_fold(params["rb_bn1"])
    s1_col = jnp.tile(s1, FIRST_OUT_W).reshape(NF1, 1)
    b1_col = jnp.tile(b1, FIRST_OUT_W).reshape(NF1, 1)

    eye4 = jnp.eye(RES_OUT_W, dtype=f32)

    # fc-BN fold + permutation from PyTorch NCHW .view(B,-1) order (c*4 + w) to
    # the kernel's position-major order (w*4 + c).
    g = jnp.arange(FC_IN)
    perm = (g % CH) * RES_OUT_W + g // CH
    sfc, shfc = bn_fold(params["fc_bn"])
    sfc_p, shfc_p = sfc[perm], shfc[perm]

    # --- downsample identity: 1x1 conv, stride (1,4) (64 -> 16); fc-BN scale folded
    wdn = params["w_down"][:, :, 0, 0].T                               # (ci, co)
    k0 = jnp.zeros((RES_OUT_W,), f32).at[0].set(1.0)
    wdn_big = jnp.einsum("ic,oq,k->okiqc", wdn, eye4, k0).reshape(NF1, FC_IN)
    wdn_fm = sfc_p.reshape(FC_IN, 1) * wdn_big.T                       # (16, 64)

    # --- conv_1 (1,4)/stride(1,4) (64 -> 16); BN2 scale folded in ---
    s2, sh2 = bn_fold(params["rb_bn2"])
    s2_p = jnp.tile(s2, RES_OUT_W)
    wc1 = params["w_conv1"][:, :, 0, :].transpose(2, 1, 0)             # (kw, ci, co)
    wc1_big = jnp.einsum("kic,oq->okiqc", wc1, eye4).reshape(NF1, FC_IN)
    wc1_fm = s2_p.reshape(FC_IN, 1) * wc1_big.T                        # (16, 64)

    # fused identity/conv_1 weight (one (32, 64) GEMM, split in-kernel)
    wih = jnp.concatenate([wdn_fm, wc1_fm], axis=0)                    # (32, 64)
    sh2_col = jnp.tile(sh2, RES_OUT_W).reshape(FC_IN, 1)

    # --- conv_2 (1,3)/stride 1/pad 1: banded operator; fc-BN scale folded in ---
    wc2 = params["w_conv2"][:, :, 0, :].transpose(2, 1, 0)             # (kw, ci, co)
    wc2_big = sum(
        jnp.einsum("pq,ic->piqc", jnp.eye(RES_OUT_W, k=1 - kw, dtype=f32), wc2[kw])
        for kw in range(3)
    ).reshape(FC_IN, FC_IN)
    wc2_fm = sfc_p.reshape(FC_IN, 1) * wc2_big.T                       # (16, 16)

    # merged bias: fc-BN-scaled downsample bias + fc-BN shift
    bdn_p = jnp.tile(params["b_down"], RES_OUT_W)
    bz_col = (sfc_p * bdn_p + shfc_p).reshape(FC_IN, 1)

    # fc linear (16 -> 32), feature-major
    wfc_fm = params["w_fc"][perm, :].T                                 # (32, 16)

    return (w1p, s1_col, b1_col, wih, sh2_col, wc2_fm, bz_col, wfc_fm)


def cnn_model_forward(params, x, *, batch_tile=4096):
    """CNNModel.forward (eval mode). x: (B, 1, 4, 64) NCHW float32 -> (B, 32)."""
    B = x.shape[0]
    ops = _prepare_operands(params)

    # NCHW flatten per sample: col index = h*64 + 4*ow + kw (C == 1).
    x2d = x.reshape(B, X_FLAT).astype(jnp.float32)

    # Batch tile becomes the lane dim of all feature-major slabs -> multiple of
    # 128; use >= 2 grid steps when the batch allows so ("parallel",) actually
    # spreads work across v7x's two TensorCores.
    tb_cap = max(128, (batch_tile // 128) * 128)
    n_blocks = -(-B // tb_cap)
    if B > 128:
        n_blocks = max(n_blocks, 2)
    tb = ((-(-B // n_blocks) + 127) // 128) * 128
    n_blocks = -(-B // tb)
    padded = n_blocks * tb
    if padded != B:
        x2d = jnp.pad(x2d, ((0, padded - B), (0, 0)))

    def weight_spec(shape):
        return pl.BlockSpec(shape, lambda i: (0, 0))        # resident across grid

    out_t = pl.pallas_call(
        _fused_cnn_kernel,
        grid=(n_blocks,),
        in_specs=[pl.BlockSpec((tb, X_FLAT), lambda i: (i, 0))]
                 + [weight_spec(op.shape) for op in ops],
        out_specs=pl.BlockSpec((FC_REPR_DIM, tb), lambda i: (0, i)),
        out_shape=jax.ShapeDtypeStruct((FC_REPR_DIM, padded), jnp.float32),
        compiler_params=pltpu.CompilerParams(
            dimension_semantics=("parallel",),               # splits across v7x TCs
            vmem_limit_bytes=32 * 1024 * 1024),
    )(x2d, *ops)

    # lane-dense (32, padded) slab back to the PyTorch (B, 32) layout (tiny).
    return out_t[:, :B].T


# ----------------------------------------------------------------------------
# Deterministic parameter construction (mirrors module __init__ shapes)
# ----------------------------------------------------------------------------
def kaiming_normal(key, shape, a=0.5):
    # nn.init.kaiming_normal_(w, a=0.5, mode='fan_out') for (Cout, Cin, KH, KW)
    fan_out = shape[0] * shape[2] * shape[3]
    gain = (2.0 / (1.0 + a * a)) ** 0.5
    return (gain / fan_out ** 0.5) * jax.random.normal(key, shape, jnp.float32)


def make_params(key):
    ks = jax.random.split(key, 6)
    bn = lambda c: (jnp.ones((c,), jnp.float32), jnp.zeros((c,), jnp.float32),
                    jnp.zeros((c,), jnp.float32), jnp.ones((c,), jnp.float32))
    return {
        # FirstCNNBlock.conv_1 : (Cout=4, Cin=1, KH=4, KW=4)
        "w_first": kaiming_normal(ks[0], (CH, IN_C, IN_H, 4)),
        # CNNResidualBlock
        "rb_bn1": bn(CH),
        "w_conv1": kaiming_normal(ks[1], (CH, CH, 1, 4)),
        "rb_bn2": bn(CH),
        "w_conv2": kaiming_normal(ks[2], (CH, CH, 1, 3)),
        "w_down": kaiming_normal(ks[3], (CH, CH, 1, 1)),
        "b_down": jax.random.uniform(ks[4], (CH,), jnp.float32, -0.5, 0.5),
        # fc head
        "fc_bn": bn(FC_IN),
        # stored as (in_features, out_features) == PyTorch weight.T ; bias=False
        "w_fc": jax.random.uniform(ks[5], (FC_IN, FC_REPR_DIM), jnp.float32,
                                   -1.0 / FC_IN ** 0.5, 1.0 / FC_IN ** 0.5),
    }


# ----------------------------------------------------------------------------
# Pure-JAX NCHW reference (eval-mode PyTorch semantics) for a self-check
# ----------------------------------------------------------------------------
def _reference_forward(params, x):
    def swish(v):
        return v * jax.nn.sigmoid(v)

    def bn(v, stats, axis):
        gamma, beta, rmean, rvar = stats
        shape = [1] * v.ndim
        shape[axis] = -1
        scale = (gamma / jnp.sqrt(rvar + 1e-5)).reshape(shape)
        shift = (beta - rmean * gamma / jnp.sqrt(rvar + 1e-5)).reshape(shape)
        return v * scale + shift

    def conv(v, w, stride, pad_w):
        return jax.lax.conv_general_dilated(
            v, w, window_strides=stride, padding=[(0, 0), (pad_w, pad_w)],
            dimension_numbers=("NCHW", "OIHW", "NCHW"))

    out = swish(conv(x, params["w_first"], (IN_H, 4), 0))
    pre = swish(bn(out, params["rb_bn1"], 1))
    ident = conv(pre, params["w_down"], (1, 4), 0) + params["b_down"].reshape(1, -1, 1, 1)
    h = conv(pre, params["w_conv1"], (1, 4), 0)
    h = swish(bn(h, params["rb_bn2"], 1))
    h = conv(h, params["w_conv2"], (1, 1), 1)
    out = h + ident
    flat = out.reshape(out.shape[0], -1)
    flat = swish(bn(flat, params["fc_bn"], 1))
    return flat @ params["w_fc"]


if __name__ == "__main__":
    key = jax.random.PRNGKey(0)
    k_params, k_x = jax.random.split(key)
    params = make_params(k_params)
    x = jax.random.normal(k_x, (2, IN_C, IN_H, IN_W), jnp.float32)   # NCHW input

    fwd = jax.jit(cnn_model_forward)
    y = jax.block_until_ready(fwd(params, x))

    assert y.shape == (2, FC_REPR_DIM), y.shape
    assert bool(jnp.all(jnp.isfinite(y)))

    y_ref = jax.block_until_ready(_reference_forward(params, x))
    assert bool(jnp.allclose(y, y_ref, atol=5e-3, rtol=5e-3)), \
        float(jnp.max(jnp.abs(y - y_ref)))

    print("KERNEL_OK")
</pallas_src>

<mosaic_0001>
module attributes {stable_mosaic.version = 11 : i64} {
  func.func @_fused_cnn_kernel(%arg0: i32, %arg1: memref<128x256xf32, #tpu.memory_space<vmem>>, %arg2: memref<256x128xf32, #tpu.memory_space<vmem>>, %arg3: memref<64x1xf32, #tpu.memory_space<vmem>>, %arg4: memref<64x1xf32, #tpu.memory_space<vmem>>, %arg5: memref<32x64xf32, #tpu.memory_space<vmem>>, %arg6: memref<16x1xf32, #tpu.memory_space<vmem>>, %arg7: memref<16x16xf32, #tpu.memory_space<vmem>>, %arg8: memref<16x1xf32, #tpu.memory_space<vmem>>, %arg9: memref<32x16xf32, #tpu.memory_space<vmem>>, %arg10: memref<32x128xf32, #tpu.memory_space<vmem>>) attributes {dimension_semantics = [#tpu.dimension_semantics<parallel>], iteration_bounds = array<i64: 1>, scalar_prefetch = 0 : i64, scratch_operands = 0 : i64, tpu.core_type = #tpu.core_type<tc>, window_params = [{transform_indices = @transform_0, window_bounds = array<i64: 128, 256>}, {pipeline_mode = #tpu.pipeline_mode<synchronous>, transform_indices = @transform_1, window_bounds = array<i64: 256, 128>}, {pipeline_mode = #tpu.pipeline_mode<synchronous>, transform_indices = @transform_2, window_bounds = array<i64: 64, 1>}, {pipeline_mode = #tpu.pipeline_mode<synchronous>, transform_indices = @transform_3, window_bounds = array<i64: 64, 1>}, {pipeline_mode = #tpu.pipeline_mode<synchronous>, transform_indices = @transform_4, window_bounds = array<i64: 32, 64>}, {pipeline_mode = #tpu.pipeline_mode<synchronous>, transform_indices = @transform_5, window_bounds = array<i64: 16, 1>}, {pipeline_mode = #tpu.pipeline_mode<synchronous>, transform_indices = @transform_6, window_bounds = array<i64: 16, 16>}, {pipeline_mode = #tpu.pipeline_mode<synchronous>, transform_indices = @transform_7, window_bounds = array<i64: 16, 1>}, {pipeline_mode = #tpu.pipeline_mode<synchronous>, transform_indices = @transform_8, window_bounds = array<i64: 32, 16>}, {transform_indices = @transform_9, window_bounds = array<i64: 32, 128>}]} {
    %c0 = arith.constant 0 : index
    %c0_0 = arith.constant 0 : index
    %0 = vector.load %arg1[%c0, %c0_0] : memref<128x256xf32, #tpu.memory_space<vmem>>, vector<128x256xf32>
    %c0_1 = arith.constant 0 : index
    %c0_2 = arith.constant 0 : index
    %1 = vector.load %arg2[%c0_1, %c0_2] : memref<256x128xf32, #tpu.memory_space<vmem>>, vector<256x128xf32>
    %cst = arith.constant dense<0.000000e+00> : vector<128x128xf32>
    %2 = tpu.matmul %0, %1, %cst {dimension_numbers = #tpu.dot_dimension_numbers<[1], [0], [0], [1], [0, 0, 1, 1], [], []>} : vector<128x256xf32>, vector<256x128xf32>, vector<128x128xf32> -> vector<128x128xf32>
    %3 = tpu.transpose %2, [1, 0] : vector<128x128xf32> -> vector<128x128xf32>
    %4 = vector.extract_strided_slice %3 {offsets = [0, 0], sizes = [64, 128], strides = [1, 1]} : vector<128x128xf32> to vector<64x128xf32>
    %cst_3 = arith.constant 5.000000e-01 : f32
    %5 = vector.broadcast %cst_3 : f32 to vector<64x128xf32>
    %6 = arith.mulf %5, %4 : vector<64x128xf32>
    %cst_4 = arith.constant 5.000000e-01 : f32
    %7 = vector.broadcast %cst_4 : f32 to vector<64x128xf32>
    %8 = arith.mulf %7, %4 : vector<64x128xf32>
    %9 = math.tanh %8 : vector<64x128xf32>
    %cst_5 = arith.constant 1.000000e+00 : f32
    %10 = vector.broadcast %cst_5 : f32 to vector<64x128xf32>
    %11 = arith.addf %9, %10 : vector<64x128xf32>
    %12 = arith.mulf %6, %11 : vector<64x128xf32>
    %c0_6 = arith.constant 0 : index
    %c0_7 = arith.constant 0 : index
    %13 = vector.load %arg3[%c0_6, %c0_7] : memref<64x1xf32, #tpu.memory_space<vmem>>, vector<64x1xf32>
    %14 = vector.broadcast %13 : vector<64x1xf32> to vector<64x128xf32>
    %15 = arith.mulf %12, %14 : vector<64x128xf32>
    %c0_8 = arith.constant 0 : index
    %c0_9 = arith.constant 0 : index
    %16 = vector.load %arg4[%c0_8, %c0_9] : memref<64x1xf32, #tpu.memory_space<vmem>>, vector<64x1xf32>
    %17 = vector.broadcast %16 : vector<64x1xf32> to vector<64x128xf32>
    %18 = arith.addf %15, %17 : vector<64x128xf32>
    %cst_10 = arith.constant 5.000000e-01 : f32
    %19 = vector.broadcast %cst_10 : f32 to vector<64x128xf32>
    %20 = arith.mulf %19, %18 : vector<64x128xf32>
    %cst_11 = arith.constant 5.000000e-01 : f32
    %21 = vector.broadcast %cst_11 : f32 to vector<64x128xf32>
    %22 = arith.mulf %21, %18 : vector<64x128xf32>
    %23 = math.tanh %22 : vector<64x128xf32>
    %cst_12 = arith.constant 1.000000e+00 : f32
    %24 = vector.broadcast %cst_12 : f32 to vector<64x128xf32>
    %25 = arith.addf %23, %24 : vector<64x128xf32>
    %26 = arith.mulf %20, %25 : vector<64x128xf32>
    %c0_13 = arith.constant 0 : index
    %c0_14 = arith.constant 0 : index
    %27 = vector.load %arg5[%c0_13, %c0_14] : memref<32x64xf32, #tpu.memory_space<vmem>>, vector<32x64xf32>
    %cst_15 = arith.constant dense<0.000000e+00> : vector<32x128xf32>
    %28 = tpu.matmul %27, %26, %cst_15 {dimension_numbers = #tpu.dot_dimension_numbers<[1], [0], [0], [1], [0, 0, 1, 1], [], []>} : vector<32x64xf32>, vector<64x128xf32>, vector<32x128xf32> -> vector<32x128xf32>
    %29 = vector.extract_strided_slice %28 {offsets = [0, 0], sizes = [16, 128], strides = [1, 1]} : vector<32x128xf32> to vector<16x128xf32>
    %30 = vector.extract_strided_slice %28 {offsets = [16, 0], sizes = [16, 128], strides = [1, 1]} : vector<32x128xf32> to vector<16x128xf32>
    %c0_16 = arith.constant 0 : index
    %c0_17 = arith.constant 0 : index
    %31 = vector.load %arg6[%c0_16, %c0_17] : memref<16x1xf32, #tpu.memory_space<vmem>>, vector<16x1xf32>
    %32 = vector.broadcast %31 : vector<16x1xf32> to vector<16x128xf32>
    %33 = arith.addf %30, %32 : vector<16x128xf32>
    %cst_18 = arith.constant 5.000000e-01 : f32
    %34 = vector.broadcast %cst_18 : f32 to vector<16x128xf32>
    %35 = arith.mulf %34, %33 : vector<16x128xf32>
    %cst_19 = arith.constant 5.000000e-01 : f32
    %36 = vector.broadcast %cst_19 : f32 to vector<16x128xf32>
    %37 = arith.mulf %36, %33 : vector<16x128xf32>
    %38 = math.tanh %37 : vector<16x128xf32>
    %cst_20 = arith.constant 1.000000e+00 : f32
    %39 = vector.broadcast %cst_20 : f32 to vector<16x128xf32>
    %40 = arith.addf %38, %39 : vector<16x128xf32>
    %41 = arith.mulf %35, %40 : vector<16x128xf32>
    %c0_21 = arith.constant 0 : index
    %c0_22 = arith.constant 0 : index
    %42 = vector.load %arg7[%c0_21, %c0_22] : memref<16x16xf32, #tpu.memory_space<vmem>>, vector<16x16xf32>
    %cst_23 = arith.constant dense<0.000000e+00> : vector<16x128xf32>
    %43 = tpu.matmul %42, %41, %cst_23 {dimension_numbers = #tpu.dot_dimension_numbers<[1], [0], [0], [1], [0, 0, 1, 1], [], []>} : vector<16x16xf32>, vector<16x128xf32>, vector<16x128xf32> -> vector<16x128xf32>
    %44 = arith.addf %43, %29 : vector<16x128xf32>
    %c0_24 = arith.constant 0 : index
    %c0_25 = arith.constant 0 : index
    %45 = vector.load %arg8[%c0_24, %c0_25] : memref<16x1xf32, #tpu.memory_space<vmem>>, vector<16x1xf32>
    %46 = vector.broadcast %45 : vector<16x1xf32> to vector<16x128xf32>
    %47 = arith.addf %44, %46 : vector<16x128xf32>
    %cst_26 = arith.constant 5.000000e-01 : f32
    %48 = vector.broadcast %cst_26 : f32 to vector<16x128xf32>
    %49 = arith.mulf %48, %47 : vector<16x128xf32>
    %cst_27 = arith.constant 5.000000e-01 : f32
    %50 = vector.broadcast %cst_27 : f32 to vector<16x128xf32>
    %51 = arith.mulf %50, %47 : vector<16x128xf32>
    %52 = math.tanh %51 : vector<16x128xf32>
    %cst_28 = arith.constant 1.000000e+00 : f32
    %53 = vector.broadcast %cst_28 : f32 to vector<16x128xf32>
    %54 = arith.addf %52, %53 : vector<16x128xf32>
    %55 = arith.mulf %49, %54 : vector<16x128xf32>
    %c0_29 = arith.constant 0 : index
    %c0_30 = arith.constant 0 : index
    %56 = vector.load %arg9[%c0_29, %c0_30] : memref<32x16xf32, #tpu.memory_space<vmem>>, vector<32x16xf32>
    %cst_31 = arith.constant dense<0.000000e+00> : vector<32x128xf32>
    %57 = tpu.matmul %56, %55, %cst_31 {dimension_numbers = #tpu.dot_dimension_numbers<[1], [0], [0], [1], [0, 0, 1, 1], [], []>} : vector<32x16xf32>, vector<16x128xf32>, vector<32x128xf32> -> vector<32x128xf32>
    %c0_32 = arith.constant 0 : index
    %c0_33 = arith.constant 0 : index
    %58 = vector.load %arg10[%c0_32, %c0_33] : memref<32x128xf32, #tpu.memory_space<vmem>>, vector<32x128xf32>
    tpu.vector_store %arg10[%c0_32, %c0_33], %57 {strides = array<i32>} : memref<32x128xf32, #tpu.memory_space<vmem>>, vector<32x128xf32>,
    return
  }
  func.func @transform_0(%arg0: i32) -> (i32, i32) {
    %c0_i32 = arith.constant 0 : i32
    %c0_i32_0 = arith.constant 0 : i32
    return %arg0, %c0_i32 : i32, i32
  }
  func.func @transform_1(%arg0: i32) -> (i32, i32) {
    %c0_i32 = arith.constant 0 : i32
    %c0_i32_0 = arith.constant 0 : i32
    %c0_i32_1 = arith.constant 0 : i32
    return %c0_i32, %c0_i32_0 : i32, i32
  }
  func.func @transform_2(%arg0: i32) -> (i32, i32) {
    %c0_i32 = arith.constant 0 : i32
    %c0_i32_0 = arith.constant 0 : i32
    %c0_i32_1 = arith.constant 0 : i32
    return %c0_i32, %c0_i32_0 : i32, i32
  }
  func.func @transform_3(%arg0: i32) -> (i32, i32) {
    %c0_i32 = arith.constant 0 : i32
    %c0_i32_0 = arith.constant 0 : i32
    %c0_i32_1 = arith.constant 0 : i32
    return %c0_i32, %c0_i32_0 : i32, i32
  }
  func.func @transform_4(%arg0: i32) -> (i32, i32) {
    %c0_i32 = arith.constant 0 : i32
    %c0_i32_0 = arith.constant 0 : i32
    %c0_i32_1 = arith.constant 0 : i32
    return %c0_i32, %c0_i32_0 : i32, i32
  }
  func.func @transform_5(%arg0: i32) -> (i32, i32) {
    %c0_i32 = arith.constant 0 : i32
    %c0_i32_0 = arith.constant 0 : i32
    %c0_i32_1 = arith.constant 0 : i32
    return %c0_i32, %c0_i32_0 : i32, i32
  }
  func.func @transform_6(%arg0: i32) -> (i32, i32) {
    %c0_i32 = arith.constant 0 : i32
    %c0_i32_0 = arith.constant 0 : i32
    %c0_i32_1 = arith.constant 0 : i32
    return %c0_i32, %c0_i32_0 : i32, i32
  }
  func.func @transform_7(%arg0: i32) -> (i32, i32) {
    %c0_i32 = arith.constant 0 : i32
    %c0_i32_0 = arith.constant 0 : i32
    %c0_i32_1 = arith.constant 0 : i32
    return %c0_i32, %c0_i32_0 : i32, i32
  }
  func.func @transform_8(%arg0: i32) -> (i32, i32) {
    %c0_i32 = arith.constant 0 : i32
    %c0_i32_0 = arith.constant 0 : i32
    %c0_i32_1 = arith.constant 0 : i32
    return %c0_i32, %c0_i32_0 : i32, i32
  }
  func.func @transform_9(%arg0: i32) -> (i32, i32) {
    %c0_i32 = arith.constant 0 : i32
    %c0_i32_0 = arith.constant 0 : i32
    return %c0_i32, %arg0 : i32, i32
  }
}

</mosaic_0001>

<llo_original>
// kernel: tile.38
$region0: #{tile.38}
  #allocation0 [shape = 's32[1]{0}', space=sflag, size = 0x4, scoped, tag = 'scoped memory for tile.38']
  %s0 = inlined_call_operand.vmem [shape: f32[4], index: 0, kind: input, shape index: {}]
  %s1 = inlined_call_operand.vmem [shape: f32[4,4], index: 1, kind: output, shape index: {}]
  // Predicated region
  $region2: #{tile.38} parent=0 // pred_check
    _
  $region3: #{tile.38} parent=0 // pred_check_branch
    %3 = sbr.rel (0) target = $region5
  $region4: #{tile.38} parent=0 // pred_region
    _
  $region5: #{tile.38} parent=0 // pred_fallthru
    _
  %v4 = vld [vmem:[%s0] ss:$0 sm:$0xff]
  %5 = vst [vmem:[%s1] sm:$0xf] %v4

// kernel: mul.26
$region0: #{mul.26}
  %s0 = inlined_call_operand.vmem [shape: f32[4,4], index: 0, kind: input, shape index: {}]
  %s1 = inlined_call_operand.vmem [shape: f32[16], index: 1, kind: output, shape index: {}]
  $region1: #{mul.26} parent=0
    #allocation0 [shape = 'u8[4096]{0}', space=vmem, size = 0x1000, scoped, tag = 'scoped mem for output reshape']
    #allocation1 [shape = 'u8[4096]{0}', space=vmem, size = 0x1000, scoped, tag = 'scoped mem for input reshape']
    %s3 = sshllo.u32 0, 4
    %v4 = vld [vmem:[%s0] sm:%s3]
    %5 = vst [vmem:[#allocation1] sm:%s3] %v4
    %v6 = vld [vmem:[#allocation1] sm:$0x1]
    %vm7 = vcmask 31744
    %8 = vst.msk [vmem:[#allocation0] sm:$0x1] %vm7, %v6
    %s9 = scalar_lea.vmem [#allocation1], 3
    %v10 = vld [vmem:[%s9] sm:$0x1]
    %11 = vrot.lane.b32.xlu0 %v10, 12
    %v12 = vpop.permute.xlu0 %11
    %vm13 = vcmask 130144
    %14 = vst.msk [vmem:[#allocation0] sm:$0x1] %vm13, %v12
    %s15 = scalar_lea.vmem [#allocation1], 2
    %v16 = vld [vmem:[%s15] sm:$0x1]
    %17 = vrot.lane.b32.xlu0 %v16, 8
    %v18 = vpop.permute.xlu0 %17
    %vm19 = vcmask 97344
    %20 = vst.msk [vmem:[#allocation0] sm:$0x1] %vm19, %v18
    %s21 = scalar_lea.vmem [#allocation1], 1
    %v22 = vld [vmem:[%s21] sm:$0x1]
    %23 = vrot.lane.b32.xlu0 %v22, 4
    %v24 = vpop.permute.xlu0 %23
    %vm25 = vcmask 64544
    %26 = vst.msk [vmem:[#allocation0] sm:$0x1] %vm25, %v24
    %s28 = sshllo.u32 0, 1
    %v30 = vld [vmem:[#allocation0] sm:%s28]
    %s31 = sshllo.u32 0, 1
    %32 = vst [vmem:[%s1] sm:%s31] %v30

// kernel: tile.48
$region0: #{tile.48}
  #allocation2 [shape = 's32[1]{0}', space=sflag, size = 0x4, scoped, tag = 'scoped memory for tile.48']
  %s0 = inlined_call_operand.hbm [shape: f32[4], index: 0, kind: input, shape index: {}]
  %s1 = inlined_call_operand.vmem [shape: f32[4,4], index: 1, kind: output, shape index: {}]
  $region1: #{tile.48} parent=0
    #allocation0 [shape = 'u8[512]{0}', space=vmem, size = 0x400, scoped, tag = 'operand span for operand 0']
    #allocation1 [shape = 's32[1]{0}', space=sflag, size = 0x4, scoped, tag = 'scoped memory for tile.48']
    %2 = vsyncpa [#allocation1], 0
    // Predicated region
    $region2: #{tile.48} parent=1 // pred_check
      _
    $region3: #{tile.48} parent=1 // pred_check_branch
      %4 = sbr.rel (0) target = $region5
    $region4: #{tile.48} parent=1 // pred_region
      %s6 = ssub.s32 16, 16
      %7 = vsyncadd [#allocation1], %s6
      %s9 = sshll.u32 [#allocation0], 4
      %s10 = int_to_ptr.vmem [resolvable:$true] %s9
      %12 = dma.hbm_to_vmem [thread:$0]  %s0, 16, %s10, [#allocation1]
    $region5: #{tile.48} parent=1 // pred_fallthru
      _
    // Predicated region
    $region6: #{tile.48} parent=1 // pred_check
      _
    $region7: #{tile.48} parent=1 // pred_check_branch
      %14 = sbr.rel (0) target = $region9
    $region8: #{tile.48} parent=1 // pred_region
      %15 = dma.done [#allocation1], 16
    $region9: #{tile.48} parent=1 // pred_fallthru
      _
    %v16 = vld [vmem:[#allocation0] ss:$0 sm:$0xff]
    %17 = vst [vmem:[%s1] sm:$0xf] %v16
    %18 = vsyncpa [#allocation1], 1

// kernel: tile.28
$region0: #{tile.28}
  #allocation0 [shape = 's32[1]{0}', space=sflag, size = 0x4, scoped, tag = 'scoped memory for tile.28']
  %s0 = inlined_call_operand.vmem [shape: f32[4], index: 0, kind: input, shape index: {}]
  %s1 = inlined_call_operand.vmem [shape: f32[16,4], index: 1, kind: output, shape index: {}]
  // Predicated region
  $region2: #{tile.28} parent=0 // pred_check
    _
  $region3: #{tile.28} parent=0 // pred_check_branch
    %3 = sbr.rel (0) target = $region5
  $region4: #{tile.28} parent=0 // pred_region
    _
  $region5: #{tile.28} parent=0 // pred_fallthru
    _
  %v4 = vld [vmem:[%s0] ss:$0 sm:$0xff]
  %5 = vst [vmem:[%s1] sm:$0xff] %v4
  %s6 = scalar_lea.vmem %s1, 8
  %7 = vst [vmem:[%s6] sm:$0xff] %v4

// kernel: tile.2
$region0: #{tile.2}
  %s0 = inlined_call_operand.vmem [shape: f32[4,4], index: 0, kind: input, shape index: {}]
  %s1 = inlined_call_operand.vmem [shape: f32[16,1], index: 1, kind: output, shape index: {}]
  $region1: #{tile.2} parent=0
    #allocation0 [shape = 'u8[4096]{0}', space=vmem, size = 0x1000, scoped, tag = 'scoped mem for input reshape']
    %s3 = sshllo.u32 0, 4
    %v4 = vld [vmem:[%s0] sm:%s3]
    %5 = vst [vmem:[#allocation0] sm:%s3] %v4
    %v6 = vld [vmem:[#allocation0] sm:$0xf]
    %vm7 = vcmask 7168
    %8 = vst.msk [vmem:[%s1] ss:$4 sm:$0xf] %vm7, %v6
    %v9 = vld [vmem:[#allocation0] sm:$0xf]
    %10 = vrot.lane.b32.xlu0 %v9, 127
    %v11 = vpop.permute.xlu0 %10
    %vm12 = vcmask 7168
    %s13 = scalar_lea.vmem %s1, 1
    %14 = vst.msk [vmem:[%s13] ss:$4 sm:$0xf] %vm12, %v11
    %v15 = vld [vmem:[#allocation0] sm:$0xf]
    %16 = vrot.lane.b32.xlu0 %v15, 126
    %v17 = vpop.permute.xlu0 %16
    %vm18 = vcmask 7168
    %s19 = scalar_lea.vmem %s1, 2
    %20 = vst.msk [vmem:[%s19] ss:$4 sm:$0xf] %vm18, %v17
    %v21 = vld [vmem:[#allocation0] sm:$0xf]
    %22 = vrot.lane.b32.xlu0 %v21, 125
    %v23 = vpop.permute.xlu0 %22
    %vm24 = vcmask 7168
    %s25 = scalar_lea.vmem %s1, 3
    %26 = vst.msk [vmem:[%s25] ss:$4 sm:$0xf] %vm24, %v23

// kernel: tile.0
$region0: #{tile.0}
  %s0 = inlined_call_operand.vmem [shape: f32[16,4], index: 0, kind: input, shape index: {}]
  %s1 = inlined_call_operand.vmem [shape: f32[64,1], index: 1, kind: output, shape index: {}]
  %v2 = vld [vmem:[%s0] sm:$0xff]
  %vm3 = vcmask 7168
  %4 = vst.msk [vmem:[%s1] ss:$4 sm:$0xff] %vm3, %v2
  %s5 = scalar_lea.vmem %s0, 8
  %v6 = vld [vmem:[%s5] sm:$0xff]
  %vm7 = vcmask 7168
  %s8 = scalar_lea.vmem %s1, 32
  %9 = vst.msk [vmem:[%s8] ss:$4 sm:$0xff] %vm7, %v6
  %v10 = vld [vmem:[%s0] sm:$0xff]
  %11 = vrot.lane.b32.xlu0 %v10, 127
  %v12 = vpop.permute.xlu0 %11
  %vm13 = vcmask 7168
  %s14 = scalar_lea.vmem %s1, 1
  %15 = vst.msk [vmem:[%s14] ss:$4 sm:$0xff] %vm13, %v12
  %s16 = scalar_lea.vmem %s0, 8
  %v17 = vld [vmem:[%s16] sm:$0xff]
  %18 = vrot.lane.b32.xlu0 %v17, 127
  %v19 = vpop.permute.xlu0 %18
  %vm20 = vcmask 7168
  %s21 = scalar_lea.vmem %s1, 33
  %22 = vst.msk [vmem:[%s21] ss:$4 sm:$0xff] %vm20, %v19
  %v23 = vld [vmem:[%s0] sm:$0xff]
  %24 = vrot.lane.b32.xlu0 %v23, 126
  %v25 = vpop.permute.xlu0 %24
  %vm26 = vcmask 7168
  %s27 = scalar_lea.vmem %s1, 2
  %28 = vst.msk [vmem:[%s27] ss:$4 sm:$0xff] %vm26, %v25
  %s29 = scalar_lea.vmem %s0, 8
  %v30 = vld [vmem:[%s29] sm:$0xff]
  %31 = vrot.lane.b32.xlu0 %v30, 126
  %v32 = vpop.permute.xlu0 %31
  %vm33 = vcmask 7168
  %s34 = scalar_lea.vmem %s1, 34
  %35 = vst.msk [vmem:[%s34] ss:$4 sm:$0xff] %vm33, %v32
  %v36 = vld [vmem:[%s0] sm:$0xff]
  %37 = vrot.lane.b32.xlu0 %v36, 125
  %v38 = vpop.permute.xlu0 %37
  %vm39 = vcmask 7168
  %s40 = scalar_lea.vmem %s1, 3
  %41 = vst.msk [vmem:[%s40] ss:$4 sm:$0xff] %vm39, %v38
  %s42 = scalar_lea.vmem %s0, 8
  %v43 = vld [vmem:[%s42] sm:$0xff]
  %44 = vrot.lane.b32.xlu0 %v43, 125
  %v45 = vpop.permute.xlu0 %44
  %vm46 = vcmask 7168
  %s47 = scalar_lea.vmem %s1, 35
  %48 = vst.msk [vmem:[%s47] ss:$4 sm:$0xff] %vm46, %v45

// kernel: cnn_model_forward.1
$region0: #{cnn_model_forward.1}
  #allocation0 [shape = 'u32[]', space=smem, size = 0x4, offset = 0x4, fixed_abs, tag = 'smem constant byte address 0x4 - core index']
  #allocation1 [shape = 'u32[144,128]{1,0:T(1,128)}', space=vmem, size = 0x12000, scoped, tag = 'internal scratch']
  %s0 = inlined_call_operand.vmem [shape: f32[128,256], index: 0, kind: input, shape index: {}]
  %s1 = inlined_call_operand.vmem [shape: f32[256,128], index: 1, kind: input, shape index: {}]
  %s2 = inlined_call_operand.vmem [shape: f32[64,1], index: 2, kind: input, shape index: {}]
  %s3 = inlined_call_operand.vmem [shape: f32[64,1], index: 3, kind: input, shape index: {}]
  %s4 = inlined_call_operand.vmem [shape: f32[32,64], index: 4, kind: input, shape index: {}]
  %s5 = inlined_call_operand.vmem [shape: f32[16,1], index: 5, kind: input, shape index: {}]
  %s6 = inlined_call_operand.vmem [shape: f32[16,16], index: 6, kind: input, shape index: {}]
  %s7 = inlined_call_operand.vmem [shape: f32[16,1], index: 7, kind: input, shape index: {}]
  %s8 = inlined_call_operand.vmem [shape: f32[32,16], index: 8, kind: input, shape index: {}]
  %s9 = inlined_call_operand.vmem [shape: f32[32,128], index: 9, kind: output, shape index: {}]
  %s10 = sld [smem:[#allocation0]]
  $region46: #{cnn_model_forward.1} parent=0
    _
  %s12 = ssub.s32 1, %s10
  %s13 = scalar_select 0, %s12, %s10
  // Predicated region
  $region2: #{cnn_model_forward.1} parent=0 // pred_check
    _
  $region3: #{cnn_model_forward.1} parent=0 // pred_check_branch
    %15 = sbr.rel (0) target = $region5
  $region4: #{cnn_model_forward.1} parent=0 // pred_region
    _
  $region5: #{cnn_model_forward.1} parent=0 // pred_fallthru
    _
  // Predicated region
  $region6: #{cnn_model_forward.1} parent=0 // pred_check
    _
  $region7: #{cnn_model_forward.1} parent=0 // pred_check_branch
    %17 = sbr.rel (0) target = $region9
  $region8: #{cnn_model_forward.1} parent=0 // pred_region
    _
  $region9: #{cnn_model_forward.1} parent=0 // pred_fallthru
    _
  // Predicated region
  $region10: #{cnn_model_forward.1} parent=0 // pred_check
    _
  $region11: #{cnn_model_forward.1} parent=0 // pred_check_branch
    %19 = sbr.rel (0) target = $region13
  $region12: #{cnn_model_forward.1} parent=0 // pred_region
    _
  $region13: #{cnn_model_forward.1} parent=0 // pred_fallthru
    _
  // Predicated region
  $region14: #{cnn_model_forward.1} parent=0 // pred_check
    _
  $region15: #{cnn_model_forward.1} parent=0 // pred_check_branch
    %21 = sbr.rel (0) target = $region17
  $region16: #{cnn_model_forward.1} parent=0 // pred_region
    _
  $region17: #{cnn_model_forward.1} parent=0 // pred_fallthru
    _
  // Predicated region
  $region18: #{cnn_model_forward.1} parent=0 // pred_check
    _
  $region19: #{cnn_model_forward.1} parent=0 // pred_check_branch
    %23 = sbr.rel (0) target = $region21
  $region20: #{cnn_model_forward.1} parent=0 // pred_region
    _
  $region21: #{cnn_model_forward.1} parent=0 // pred_fallthru
    _
  // Predicated region
  $region22: #{cnn_model_forward.1} parent=0 // pred_check
    _
  $region23: #{cnn_model_forward.1} parent=0 // pred_check_branch
    %25 = sbr.rel (0) target = $region25
  $region24: #{cnn_model_forward.1} parent=0 // pred_region
    _
  $region25: #{cnn_model_forward.1} parent=0 // pred_fallthru
    _
  // Predicated region
  $region26: #{cnn_model_forward.1} parent=0 // pred_check
    _
  $region27: #{cnn_model_forward.1} parent=0 // pred_check_branch
    %27 = sbr.rel (0) target = $region29
  $region28: #{cnn_model_forward.1} parent=0 // pred_region
    _
  $region29: #{cnn_model_forward.1} parent=0 // pred_fallthru
    _
  // Predicated region
  $region30: #{cnn_model_forward.1} parent=0 // pred_check
    _
  $region31: #{cnn_model_forward.1} parent=0 // pred_check_branch
    %29 = sbr.rel (0) target = $region33
  $region32: #{cnn_model_forward.1} parent=0 // pred_region
    _
  $region33: #{cnn_model_forward.1} parent=0 // pred_fallthru
    _
  // Predicated region
  $region34: #{cnn_model_forward.1} parent=0 // pred_check
    _
  $region35: #{cnn_model_forward.1} parent=0 // pred_check_branch
    %31 = sbr.rel (0) target = $region37
  $region36: #{cnn_model_forward.1} parent=0 // pred_region
    _
  $region37: #{cnn_model_forward.1} parent=0 // pred_fallthru
    _
  %v32 = vld [vmem:[%s0] sm:$0xff]
  %v33 = vld [vmem:[%s0 + $0x8] sm:$0xff]
  %v34 = vld [vmem:[%s0 + $0x10] sm:$0xff]
  %v35 = vld [vmem:[%s0 + $0x18] sm:$0xff]
  %v36 = vld [vmem:[%s0 + $0x20] sm:$0xff]
  %v37 = vld [vmem:[%s0 + $0x28] sm:$0xff]
  %v38 = vld [vmem:[%s0 + $0x30] sm:$0xff]
  %v39 = vld [vmem:[%s0 + $0x38] sm:$0xff]
  %v40 = vld [vmem:[%s0 + $0x40] sm:$0xff]
  %v41 = vld [vmem:[%s0 + $0x48] sm:$0xff]
  %v42 = vld [vmem:[%s0 + $0x50] sm:$0xff]
  %v43 = vld [vmem:[%s0 + $0x58] sm:$0xff]
  %v44 = vld [vmem:[%s0 + $0x60] sm:$0xff]
  %v45 = vld [vmem:[%s0 + $0x68] sm:$0xff]
  %v46 = vld [vmem:[%s0 + $0x70] sm:$0xff]
  %v47 = vld [vmem:[%s0 + $0x78] sm:$0xff]
  %v48 = vld [vmem:[%s0 + $0x80] sm:$0xff]
  %v49 = vld [vmem:[%s0 + $0x88] sm:$0xff]
  %v50 = vld [vmem:[%s0 + $0x90] sm:$0xff]
  %v51 = vld [vmem:[%s0 + $0x98] sm:$0xff]
  %v52 = vld [vmem:[%s0 + $0xa0] sm:$0xff]
  %v53 = vld [vmem:[%s0 + $0xa8] sm:$0xff]
  %v54 = vld [vmem:[%s0 + $0xb0] sm:$0xff]
  %v55 = vld [vmem:[%s0 + $0xb8] sm:$0xff]
  %v56 = vld [vmem:[%s0 + $0xc0] sm:$0xff]
  %v57 = vld [vmem:[%s0 + $0xc8] sm:$0xff]
  %v58 = vld [vmem:[%s0 + $0xd0] sm:$0xff]
  %v59 = vld [vmem:[%s0 + $0xd8] sm:$0xff]
  %v60 = vld [vmem:[%s0 + $0xe0] sm:$0xff]
  %v61 = vld [vmem:[%s0 + $0xe8] sm:$0xff]
  %v62 = vld [vmem:[%s0 + $0xf0] sm:$0xff]
  %v63 = vld [vmem:[%s0 + $0xf8] sm:$0xff]
  %v64 = vld [vmem:[%s1] sm:$0xff]
  %v65 = vld [vmem:[%s1 + $0x8] sm:$0xff]
  %v66 = vld [vmem:[%s1 + $0x10] sm:$0xff]
  %v67 = vld [vmem:[%s1 + $0x18] sm:$0xff]
  %v68 = vld [vmem:[%s1 + $0x20] sm:$0xff]
  %v69 = vld [vmem:[%s1 + $0x28] sm:$0xff]
  %v70 = vld [vmem:[%s1 + $0x30] sm:$0xff]
  %v71 = vld [vmem:[%s1 + $0x38] sm:$0xff]
  %v72 = vld [vmem:[%s1 + $0x40] sm:$0xff]
  %v73 = vld [vmem:[%s1 + $0x48] sm:$0xff]
  %v74 = vld [vmem:[%s1 + $0x50] sm:$0xff]
  %v75 = vld [vmem:[%s1 + $0x58] sm:$0xff]
  %v76 = vld [vmem:[%s1 + $0x60] sm:$0xff]
  %v77 = vld [vmem:[%s1 + $0x68] sm:$0xff]
  %v78 = vld [vmem:[%s1 + $0x70] sm:$0xff]
  %v79 = vld [vmem:[%s1 + $0x78] sm:$0xff]
  %v80 = vld [vmem:[%s1 + $0x80] sm:$0xff]
  %v81 = vld [vmem:[%s1 + $0x88] sm:$0xff]
  %v82 = vld [vmem:[%s1 + $0x90] sm:$0xff]
  %v83 = vld [vmem:[%s1 + $0x98] sm:$0xff]
  %v84 = vld [vmem:[%s1 + $0xa0] sm:$0xff]
  %v85 = vld [vmem:[%s1 + $0xa8] sm:$0xff]
  %v86 = vld [vmem:[%s1 + $0xb0] sm:$0xff]
  %v87 = vld [vmem:[%s1 + $0xb8] sm:$0xff]
  %v88 = vld [vmem:[%s1 + $0xc0] sm:$0xff]
  %v89 = vld [vmem:[%s1 + $0xc8] sm:$0xff]
  %v90 = vld [vmem:[%s1 + $0xd0] sm:$0xff]
  %v91 = vld [vmem:[%s1 + $0xd8] sm:$0xff]
  %v92 = vld [vmem:[%s1 + $0xe0] sm:$0xff]
  %v93 = vld [vmem:[%s1 + $0xe8] sm:$0xff]
  %v94 = vld [vmem:[%s1 + $0xf0] sm:$0xff]
  %v95 = vld [vmem:[%s1 + $0xf8] sm:$0xff]
  %96 = vmatprep.subr.mxu0 0.0
  %97 = vmatpush1.msra.mxu0 %v64
  %98 = vmatprep.subr.mxu0 0.0
  %99 = vmatpush1.msra.mxu0 %v65
  %100 = vmatprep.subr.mxu0 0.0
  %101 = vmatpush1.msra.mxu0 %v66
  %102 = vmatprep.subr.mxu0 0.0
  %103 = vmatpush1.msra.mxu0 %v67
  %104 = vmatprep.subr.mxu0 0.0
  %105 = vmatpush1.msra.mxu0 %v68
  %106 = vmatprep.subr.mxu0 0.0
  %107 = vmatpush1.msra.mxu0 %v69
  %108 = vmatprep.subr.mxu0 0.0
  %109 = vmatpush1.msra.mxu0 %v70
  %110 = vmatprep.subr.mxu0 0.0
  %111 = vmatpush1.msra.mxu0 %v71
  %112 = vmatprep.subr.mxu0 0.0
  %113 = vmatpush1.msra.mxu0 %v72
  %114 = vmatprep.subr.mxu0 0.0
  %115 = vmatpush1.msra.mxu0 %v73
  %116 = vmatprep.subr.mxu0 0.0
  %117 = vmatpush1.msra.mxu0 %v74
  %118 = vmatprep.subr.mxu0 0.0
  %119 = vmatpush1.msra.mxu0 %v75
  %120 = vmatprep.subr.mxu0 0.0
  %121 = vmatpush1.msra.mxu0 %v76
  %122 = vmatprep.subr.mxu0 0.0
  %123 = vmatpush1.msra.mxu0 %v77
  %124 = vmatprep.subr.mxu0 0.0
  %125 = vmatpush1.msra.mxu0 %v78
  %126 = vmatprep.subr.mxu0 0.0
  %127 = vmatpush1.msra.mxu0 %v79
  %128 = vmatprep.subr.mxu0 0.0
  %129 = vmatpush1.msra.mxu0 %v80
  %130 = vmatprep.subr.mxu0 0.0
  %131 = vmatpush1.msra.mxu0 %v81
  %132 = vmatprep.subr.mxu0 0.0
  %133 = vmatpush1.msra.mxu0 %v82
  %134 = vmatprep.subr.mxu0 0.0
  %135 = vmatpush1.msra.mxu0 %v83
  %136 = vmatprep.subr.mxu0 0.0
  %137 = vmatpush1.msra.mxu0 %v84
  %138 = vmatprep.subr.mxu0 0.0
  %139 = vmatpush1.msra.mxu0 %v85
  %140 = vmatprep.subr.mxu0 0.0
  %141 = vmatpush1.msra.mxu0 %v86
  %142 = vmatprep.subr.mxu0 0.0
  %143 = vmatpush1.msra.mxu0 %v87
  %144 = vmatprep.subr.mxu0 0.0
  %145 = vmatpush1.msra.mxu0 %v88
  %146 = vmatprep.subr.mxu0 0.0
  %147 = vmatpush1.msra.mxu0 %v89
  %148 = vmatprep.subr.mxu0 0.0
  %149 = vmatpush1.msra.mxu0 %v90
  %150 = vmatprep.subr.mxu0 0.0
  %151 = vmatpush1.msra.mxu0 %v91
  %152 = vmatprep.subr.mxu0 0.0
  %153 = vmatpush1.msra.mxu0 %v92
  %154 = vmatprep.subr.mxu0 0.0
  %155 = vmatpush1.msra.mxu0 %v93
  %156 = vmatprep.subr.mxu0 0.0
  %157 = vmatpush1.msra.mxu0 %v94
  %158 = vmatprep.subr.mxu0 0.0
  %159 = vmatpush1.msra.mxu0 %v95
  %160 = vmatprep.mubr.f32.mxu0 %v33
  %161 = vmatmul.mubr.f32.gmra.mrb[0].mxu0 %v32
  %v162 = vpop.f32.mrb[0].mxu0
  %v163 = vadd.f32 0.0, %v162
  %v164 = vpop.f32.mrb[0].mxu0
  %165 = vmatprep.mubr.f32.mxu0 %v35
  %166 = vmatmul.mubr.f32.gmra.mrb[0].mxu0 %v34
  %v167 = vpop.f32.mrb[0].mxu0
  %v168 = vadd.f32 0.0, %v167
  %v169 = vpop.f32.mrb[0].mxu0
  %170 = vmatprep.mubr.f32.mxu0 %v37
  %171 = vmatmul.mubr.f32.gmra.mrb[0].mxu0 %v36
  %v172 = vpop.f32.mrb[0].mxu0
  %v173 = vadd.f32 0.0, %v172
  %v174 = vpop.f32.mrb[0].mxu0
  %175 = vmatprep.mubr.f32.mxu0 %v39
  %176 = vmatmul.mubr.f32.gmra.mrb[0].mxu0 %v38
  %v177 = vpop.f32.mrb[0].mxu0
  %v178 = vadd.f32 0.0, %v177
  %v179 = vpop.f32.mrb[0].mxu0
  %180 = vmatprep.mubr.f32.mxu0 %v41
  %181 = vmatmul.mubr.f32.gmra.mrb[0].mxu0 %v40
  %v182 = vpop.f32.mrb[0].mxu0
  %v183 = vadd.f32 0.0, %v182
  %v184 = vpop.f32.mrb[0].mxu0
  %185 = vmatprep.mubr.f32.mxu0 %v43
  %186 = vmatmul.mubr.f32.gmra.mrb[0].mxu0 %v42
  %v187 = vpop.f32.mrb[0].mxu0
  %v188 = vadd.f32 0.0, %v187
  %v189 = vpop.f32.mrb[0].mxu0
  %190 = vmatprep.mubr.f32.mxu0 %v45
  %191 = vmatmul.mubr.f32.gmra.mrb[0].mxu0 %v44
  %v192 = vpop.f32.mrb[0].mxu0
  %v193 = vadd.f32 0.0, %v192
  %v194 = vpop.f32.mrb[0].mxu0
  %195 = vmatprep.mubr.f32.mxu0 %v47
  %196 = vmatmul.mubr.f32.gmra.mrb[0].mxu0 %v46
  %v197 = vpop.f32.mrb[0].mxu0
  %v198 = vadd.f32 0.0, %v197
  %v199 = vpop.f32.mrb[0].mxu0
  %200 = vmatprep.mubr.f32.mxu0 %v49
  %201 = vmatmul.mubr.f32.gmra.mrb[0].mxu0 %v48
  %v202 = vpop.f32.mrb[0].mxu0
  %v203 = vadd.f32 0.0, %v202
  %v204 = vpop.f32.mrb[0].mxu0
  %205 = vmatprep.mubr.f32.mxu0 %v51
  %206 = vmatmul.mubr.f32.gmra.mrb[0].mxu0 %v50
  %v207 = vpop.f32.mrb[0].mxu0
  %v208 = vadd.f32 0.0, %v207
  %v209 = vpop.f32.mrb[0].mxu0
  %210 = vmatprep.mubr.f32.mxu0 %v53
  %211 = vmatmul.mubr.f32.gmra.mrb[0].mxu0 %v52
  %v212 = vpop.f32.mrb[0].mxu0
  %v213 = vadd.f32 0.0, %v212
  %v214 = vpop.f32.mrb[0].mxu0
  %215 = vmatprep.mubr.f32.mxu0 %v55
  %216 = vmatmul.mubr.f32.gmra.mrb[0].mxu0 %v54
  %v217 = vpop.f32.mrb[0].mxu0
  %v218 = vadd.f32 0.0, %v217
  %v219 = vpop.f32.mrb[0].mxu0
  %220 = vmatprep.mubr.f32.mxu0 %v57
  %221 = vmatmul.mubr.f32.gmra.mrb[0].mxu0 %v56
  %v222 = vpop.f32.mrb[0].mxu0
  %v223 = vadd.f32 0.0, %v222
  %v224 = vpop.f32.mrb[0].mxu0
  %225 = vmatprep.mubr.f32.mxu0 %v59
  %226 = vmatmul.mubr.f32.gmra.mrb[0].mxu0 %v58
  %v227 = vpop.f32.mrb[0].mxu0
  %v228 = vadd.f32 0.0, %v227
  %v229 = vpop.f32.mrb[0].mxu0
  %230 = vmatprep.mubr.f32.mxu0 %v61
  %231 = vmatmul.mubr.f32.gmra.mrb[0].mxu0 %v60
  %v232 = vpop.f32.mrb[0].mxu0
  %v233 = vadd.f32 0.0, %v232
  %v234 = vpop.f32.mrb[0].mxu0
  %235 = vmatprep.mubr.f32.mxu0 %v63
  %236 = vmatmul.mubr.f32.gmra.mrb[0].mxu0 %v62
  %v237 = vpop.f32.mrb[0].mxu0
  %v238 = vadd.f32 0.0, %v237
  %v239 = vpop.f32.mrb[0].mxu0
  %240 = vdwg.mxu0
  %241 = vxpose.xlu0.b32.start [1/16] %v163, 128
  %242 = vxpose.xlu0.b32.cont [2/16] %v168, 128
  %243 = vxpose.xlu0.b32.cont [3/16] %v173, 128
  %244 = vxpose.xlu0.b32.cont [4/16] %v178, 128
  %245 = vxpose.xlu0.b32.cont [5/16] %v183, 128
  %246 = vxpose.xlu0.b32.cont [6/16] %v188, 128
  %247 = vxpose.xlu0.b32.cont [7/16] %v193, 128
  %248 = vxpose.xlu0.b32.cont [8/16] %v198, 128
  %249 = vxpose.xlu0.b32.cont [9/16] %v203, 128
  %250 = vxpose.xlu0.b32.cont [10/16] %v208, 128
  %251 = vxpose.xlu0.b32.cont [11/16] %v213, 128
  %252 = vxpose.xlu0.b32.cont [12/16] %v218, 128
  %253 = vxpose.xlu0.b32.cont [13/16] %v223, 128
  %254 = vxpose.xlu0.b32.cont [14/16] %v228, 128
  %255 = vxpose.xlu0.b32.cont [15/16] %v233, 128
  %256 = vxpose.xlu0.b32.end [16/16] %v238, 128
  %v257 = vpop.trf.xlu0
  %v258 = vpop.trf.xlu0
  %v259 = vpop.trf.xlu0
  %v260 = vpop.trf.xlu0
  %v261 = vpop.trf.xlu0
  %v262 = vpop.trf.xlu0
  %v263 = vpop.trf.xlu0
  %v264 = vpop.trf.xlu0
  %v265 = vpop.trf.xlu0
  %v266 = vpop.trf.xlu0
  %v267 = vpop.trf.xlu0
  %v268 = vpop.trf.xlu0
  %v269 = vpop.trf.xlu0
  %v270 = vpop.trf.xlu0
  %v271 = vpop.trf.xlu0
  %v272 = vpop.trf.xlu0
  %v273 = vmul.f32 %v257, 0.5
  %v274 = vmul.f32 %v258, 0.5
  %v275 = vmul.f32 %v259, 0.5
  %v276 = vmul.f32 %v260, 0.5
  %v277 = vmul.f32 %v261, 0.5
  %v278 = vmul.f32 %v262, 0.5
  %v279 = vmul.f32 %v263, 0.5
  %v280 = vmul.f32 %v264, 0.5
  %v281 = vtanh.pop %v273
  %v282 = vtanh.pop %v274
  %v283 = vtanh.pop %v275
  %v284 = vtanh.pop %v276
  %v285 = vtanh.pop %v277
  %v286 = vtanh.pop %v278
  %v287 = vtanh.pop %v279
  %v288 = vtanh.pop %v280
  %v289 = vadd.f32 %v281, 1.0
  %v290 = vadd.f32 %v282, 1.0
  %v291 = vadd.f32 %v283, 1.0
  %v292 = vadd.f32 %v284, 1.0
  %v293 = vadd.f32 %v285, 1.0
  %v294 = vadd.f32 %v286, 1.0
  %v295 = vadd.f32 %v287, 1.0
  %v296 = vadd.f32 %v288, 1.0
  %v297 = vmul.f32 %v273, %v289
  %v298 = vmul.f32 %v274, %v290
  %v299 = vmul.f32 %v275, %v291
  %v300 = vmul.f32 %v276, %v292
  %v301 = vmul.f32 %v277, %v293
  %v302 = vmul.f32 %v278, %v294
  %v303 = vmul.f32 %v279, %v295
  %v304 = vmul.f32 %v280, %v296
  %v305 = vld [vmem:[%s2] sm:$0xff]
  %v306 = vld [vmem:[%s2 + $0x8] sm:$0xff]
  %v307 = vld [vmem:[%s2 + $0x10] sm:$0xff]
  %v308 = vld [vmem:[%s2 + $0x18] sm:$0xff]
  %v309 = vld [vmem:[%s2 + $0x20] sm:$0xff]
  %v310 = vld [vmem:[%s2 + $0x28] sm:$0xff]
  %v311 = vld [vmem:[%s2 + $0x30] sm:$0xff]
  %v312 = vld [vmem:[%s2 + $0x38] sm:$0xff]
  %314 = vset.pattern.permute.xlu0 0
  %315 = vperm.xlu0 %314, %v305
  %v316 = vpop.permute.xlu0 %315
  %319 = vset.pattern.permute.xlu0 0
  %320 = vperm.xlu0 %319, %v306
  %v321 = vpop.permute.xlu0 %320
  %324 = vset.pattern.permute.xlu0 0
  %325 = vperm.xlu0 %324, %v307
  %v326 = vpop.permute.xlu0 %325
  %329 = vset.pattern.permute.xlu0 0
  %330 = vperm.xlu0 %329, %v308
  %v331 = vpop.permute.xlu0 %330
  %334 = vset.pattern.permute.xlu0 0
  %335 = vperm.xlu0 %334, %v309
  %v336 = vpop.permute.xlu0 %335
  %339 = vset.pattern.permute.xlu0 0
  %340 = vperm.xlu0 %339, %v310
  %v341 = vpop.permute.xlu0 %340
  %344 = vset.pattern.permute.xlu0 0
  %345 = vperm.xlu0 %344, %v311
  %v346 = vpop.permute.xlu0 %345
  %349 = vset.pattern.permute.xlu0 0
  %350 = vperm.xlu0 %349, %v312
  %v351 = vpop.permute.xlu0 %350
  %v353 = vmul.f32 %v297, %v316
  %v354 = vmul.f32 %v298, %v321
  %v355 = vmul.f32 %v299, %v326
  %v356 = vmul.f32 %v300, %v331
  %v357 = vmul.f32 %v301, %v336
  %v358 = vmul.f32 %v302, %v341
  %v359 = vmul.f32 %v303, %v346
  %v360 = vmul.f32 %v304, %v351
  %v361 = vld [vmem:[%s3] sm:$0xff]
  %v362 = vld [vmem:[%s3 + $0x8] sm:$0xff]
  %v363 = vld [vmem:[%s3 + $0x10] sm:$0xff]
  %v364 = vld [vmem:[%s3 + $0x18] sm:$0xff]
  %v365 = vld [vmem:[%s3 + $0x20] sm:$0xff]
  %v366 = vld [vmem:[%s3 + $0x28] sm:$0xff]
  %v367 = vld [vmem:[%s3 + $0x30] sm:$0xff]
  %v368 = vld [vmem:[%s3 + $0x38] sm:$0xff]
  %370 = vset.pattern.permute.xlu0 0
  %371 = vperm.xlu0 %370, %v361
  %v372 = vpop.permute.xlu0 %371
  %375 = vset.pattern.permute.xlu0 0
  %376 = vperm.xlu0 %375, %v362
  %v377 = vpop.permute.xlu0 %376
  %380 = vset.pattern.permute.xlu0 0
  %381 = vperm.xlu0 %380, %v363
  %v382 = vpop.permute.xlu0 %381
  %385 = vset.pattern.permute.xlu0 0
  %386 = vperm.xlu0 %385, %v364
  %v387 = vpop.permute.xlu0 %386
  %390 = vset.pattern.permute.xlu0 0
  %391 = vperm.xlu0 %390, %v365
  %v392 = vpop.permute.xlu0 %391
  %395 = vset.pattern.permute.xlu0 0
  %396 = vperm.xlu0 %395, %v366
  %v397 = vpop.permute.xlu0 %396
  %400 = vset.pattern.permute.xlu0 0
  %401 = vperm.xlu0 %400, %v367
  %v402 = vpop.permute.xlu0 %401
  %405 = vset.pattern.permute.xlu0 0
  %406 = vperm.xlu0 %405, %v368
  %v407 = vpop.permute.xlu0 %406
  %v409 = vadd.f32 %v353, %v372
  %v410 = vadd.f32 %v354, %v377
  %v411 = vadd.f32 %v355, %v382
  %v412 = vadd.f32 %v356, %v387
  %v413 = vadd.f32 %v357, %v392
  %v414 = vadd.f32 %v358, %v397
  %v415 = vadd.f32 %v359, %v402
  %v416 = vadd.f32 %v360, %v407
  %v417 = vmul.f32 %v409, 0.5
  %v418 = vmul.f32 %v410, 0.5
  %v419 = vmul.f32 %v411, 0.5
  %v420 = vmul.f32 %v412, 0.5
  %v421 = vmul.f32 %v413, 0.5
  %v422 = vmul.f32 %v414, 0.5
  %v423 = vmul.f32 %v415, 0.5
  %v424 = vmul.f32 %v416, 0.5
  %v425 = vtanh.pop %v417
  %v426 = vtanh.pop %v418
  %v427 = vtanh.pop %v419
  %v428 = vtanh.pop %v420
  %v429 = vtanh.pop %v421
  %v430 = vtanh.pop %v422
  %v431 = vtanh.pop %v423
  %v432 = vtanh.pop %v424
  %v433 = vadd.f32 %v425, 1.0
  %v434 = vadd.f32 %v426, 1.0
  %v435 = vadd.f32 %v427, 1.0
  %v436 = vadd.f32 %v428, 1.0
  %v437 = vadd.f32 %v429, 1.0
  %v438 = vadd.f32 %v430, 1.0
  %v439 = vadd.f32 %v431, 1.0
  %v440 = vadd.f32 %v432, 1.0
  %v441 = vmul.f32 %v417, %v433
  %v442 = vmul.f32 %v418, %v434
  %v443 = vmul.f32 %v419, %v435
  %v444 = vmul.f32 %v420, %v436
  %v445 = vmul.f32 %v421, %v437
  %v446 = vmul.f32 %v422, %v438
  %v447 = vmul.f32 %v423, %v439
  %v448 = vmul.f32 %v424, %v440
  %v449 = vld [vmem:[%s4] sm:$0xff]
  %v450 = vld [vmem:[%s4 + $0x8] sm:$0xff]
  %v451 = vld [vmem:[%s4 + $0x10] sm:$0xff]
  %v452 = vld [vmem:[%s4 + $0x18] sm:$0xff]
  %vm453 = vcmask 523264
  %v455 = vsel %vm453, %v449, 0
  %v458 = vsel %vm453, %v450, 0
  %v461 = vsel %vm453, %v451, 0
  %v464 = vsel %vm453, %v452, 0
  %466 = vmatprep.subr.mxu0 0.0
  %467 = vmatpush1.msra.mxu0 %v441
  %468 = vmatprep.subr.mxu0 0.0
  %469 = vmatpush1.msra.mxu0 %v442
  %470 = vmatprep.subr.mxu0 0.0
  %471 = vmatpush1.msra.mxu0 %v443
  %472 = vmatprep.subr.mxu0 0.0
  %473 = vmatpush1.msra.mxu0 %v444
  %474 = vmatprep.subr.mxu0 0.0
  %475 = vmatpush1.msra.mxu0 %v445
  %476 = vmatprep.subr.mxu0 0.0
  %477 = vmatpush1.msra.mxu0 %v446
  %478 = vmatprep.subr.mxu0 0.0
  %479 = vmatpush1.msra.mxu0 %v447
  %480 = vmatprep.subr.mxu0 0.0
  %481 = vmatpush1.msra.mxu0 %v448
  %482 = vmatprep.subr.mxu0 0.0
  %483 = vmatpush1.msra.mxu0 0.0
  %484 = vmatprep.subr.mxu0 0.0
  %485 = vmatpush1.msra.mxu0 0.0
  %486 = vmatprep.subr.mxu0 0.0
  %487 = vmatpush1.msra.mxu0 0.0
  %488 = vmatprep.subr.mxu0 0.0
  %489 = vmatpush1.msra.mxu0 0.0
  %490 = vmatprep.subr.mxu0 0.0
  %491 = vmatpush1.msra.mxu0 0.0
  %492 = vmatprep.subr.mxu0 0.0
  %493 = vmatpush1.msra.mxu0 0.0
  %494 = vmatprep.subr.mxu0 0.0
  %495 = vmatpush1.msra.mxu0 0.0
  %496 = vmatprep.subr.mxu0 0.0
  %497 = vmatpush1.msra.mxu0 0.0
  %498 = vmatprep.subr.mxu0 0.0
  %499 = vmatpush1.msra.mxu0 0.0
  %500 = vmatprep.subr.mxu0 0.0
  %501 = vmatpush1.msra.mxu0 0.0
  %502 = vmatprep.subr.mxu0 0.0
  %503 = vmatpush1.msra.mxu0 0.0
  %504 = vmatprep.subr.mxu0 0.0
  %505 = vmatpush1.msra.mxu0 0.0
  %506 = vmatprep.subr.mxu0 0.0
  %507 = vmatpush1.msra.mxu0 0.0
  %508 = vmatprep.subr.mxu0 0.0
  %509 = vmatpush1.msra.mxu0 0.0
  %510 = vmatprep.subr.mxu0 0.0
  %511 = vmatpush1.msra.mxu0 0.0
  %512 = vmatprep.subr.mxu0 0.0
  %513 = vmatpush1.msra.mxu0 0.0
  %514 = vmatprep.subr.mxu0 0.0
  %515 = vmatpush1.msra.mxu0 0.0
  %516 = vmatprep.subr.mxu0 0.0
  %517 = vmatpush1.msra.mxu0 0.0
  %518 = vmatprep.subr.mxu0 0.0
  %519 = vmatpush1.msra.mxu0 0.0
  %520 = vmatprep.subr.mxu0 0.0
  %521 = vmatpush1.msra.mxu0 0.0
  %522 = vmatprep.subr.mxu0 0.0
  %523 = vmatpush1.msra.mxu0 0.0
  %524 = vmatprep.subr.mxu0 0.0
  %525 = vmatpush1.msra.mxu0 0.0
  %526 = vmatprep.subr.mxu0 0.0
  %527 = vmatpush1.msra.mxu0 0.0
  %528 = vmatprep.subr.mxu0 0.0
  %529 = vmatpush1.msra.mxu0 0.0
  %530 = vmatprep.mubr.f32.mxu0 0.0
  %531 = vmatmul.mubr.f32.gmra.mrb[0].mxu0 %v455
  %v532 = vpop.f32.mrb[0].mxu0
  %v533 = vadd.f32 0.0, %v532
  %v534 = vpop.f32.mrb[0].mxu0
  %535 = vmatprep.mubr.f32.mxu0 0.0
  %536 = vmatmul.mubr.f32.gmra.mrb[0].mxu0 %v458
  %v537 = vpop.f32.mrb[0].mxu0
  %v538 = vadd.f32 0.0, %v537
  %v539 = vpop.f32.mrb[0].mxu0
  %540 = vmatprep.mubr.f32.mxu0 0.0
  %541 = vmatmul.mubr.f32.gmra.mrb[0].mxu0 %v461
  %v542 = vpop.f32.mrb[0].mxu0
  %v543 = vadd.f32 0.0, %v542
  %v544 = vpop.f32.mrb[0].mxu0
  %545 = vmatprep.mubr.f32.mxu0 0.0
  %546 = vmatmul.mubr.f32.gmra.mrb[0].mxu0 %v464
  %v547 = vpop.f32.mrb[0].mxu0
  %v548 = vadd.f32 0.0, %v547
  %v549 = vpop.f32.mrb[0].mxu0
  %550 = vdwg.mxu0
  %v551 = vld [vmem:[%s5] sm:$0xff]
  %v552 = vld [vmem:[%s5 + $0x8] sm:$0xff]
  %554 = vset.pattern.permute.xlu0 0
  %555 = vperm.xlu0 %554, %v551
  %v556 = vpop.permute.xlu0 %555
  %559 = vset.pattern.permute.xlu0 0
  %560 = vperm.xlu0 %559, %v552
  %v561 = vpop.permute.xlu0 %560
  %v563 = vadd.f32 %v543, %v556
  %v564 = vadd.f32 %v548, %v561
  %v565 = vmul.f32 %v563, 0.5
  %v566 = vmul.f32 %v564, 0.5
  %v567 = vtanh.pop %v565
  %v568 = vtanh.pop %v566
  %v569 = vadd.f32 %v567, 1.0
  %v570 = vadd.f32 %v568, 1.0
  %v571 = vmul.f32 %v565, %v569
  %v572 = vmul.f32 %v566, %v570
  %v573 = vld [vmem:[%s6] sm:$0xff]
  %v574 = vld [vmem:[%s6 + $0x8] sm:$0xff]
  %vm575 = vcmask 130048
  %v577 = vsel %vm575, %v573, 0
  %v580 = vsel %vm575, %v574, 0
  %582 = vmatprep.subr.mxu0 0.0
  %583 = vmatpush1.msra.mxu0 %v571
  %584 = vmatprep.subr.mxu0 0.0
  %585 = vmatpush1.msra.mxu0 %v572
  %586 = vmatprep.subr.mxu0 0.0
  %587 = vmatpush1.msra.mxu0 0.0
  %588 = vmatprep.subr.mxu0 0.0
  %589 = vmatpush1.msra.mxu0 0.0
  %590 = vmatprep.subr.mxu0 0.0
  %591 = vmatpush1.msra.mxu0 0.0
  %592 = vmatprep.subr.mxu0 0.0
  %593 = vmatpush1.msra.mxu0 0.0
  %594 = vmatprep.subr.mxu0 0.0
  %595 = vmatpush1.msra.mxu0 0.0
  %596 = vmatprep.subr.mxu0 0.0
  %597 = vmatpush1.msra.mxu0 0.0
  %598 = vmatprep.subr.mxu0 0.0
  %599 = vmatpush1.msra.mxu0 0.0
  %600 = vmatprep.subr.mxu0 0.0
  %601 = vmatpush1.msra.mxu0 0.0
  %602 = vmatprep.subr.mxu0 0.0
  %603 = vmatpush1.msra.mxu0 0.0
  %604 = vmatprep.subr.mxu0 0.0
  %605 = vmatpush1.msra.mxu0 0.0
  %606 = vmatprep.subr.mxu0 0.0
  %607 = vmatpush1.msra.mxu0 0.0
  %608 = vmatprep.subr.mxu0 0.0
  %609 = vmatpush1.msra.mxu0 0.0
  %610 = vmatprep.subr.mxu0 0.0
  %611 = vmatpush1.msra.mxu0 0.0
  %612 = vmatprep.subr.mxu0 0.0
  %613 = vmatpush1.msra.mxu0 0.0
  %614 = vmatprep.subr.mxu0 0.0
  %615 = vmatpush1.msra.mxu0 0.0
  %616 = vmatprep.subr.mxu0 0.0
  %617 = vmatpush1.msra.mxu0 0.0
  %618 = vmatprep.subr.mxu0 0.0
  %619 = vmatpush1.msra.mxu0 0.0
  %620 = vmatprep.subr.mxu0 0.0
  %621 = vmatpush1.msra.mxu0 0.0
  %622 = vmatprep.subr.mxu0 0.0
  %623 = vmatpush1.msra.mxu0 0.0
  %624 = vmatprep.subr.mxu0 0.0
  %625 = vmatpush1.msra.mxu0 0.0
  %626 = vmatprep.subr.mxu0 0.0
  %627 = vmatpush1.msra.mxu0 0.0
  %628 = vmatprep.subr.mxu0 0.0
  %629 = vmatpush1.msra.mxu0 0.0
  %630 = vmatprep.subr.mxu0 0.0
  %631 = vmatpush1.msra.mxu0 0.0
  %632 = vmatprep.subr.mxu0 0.0
  %633 = vmatpush1.msra.mxu0 0.0
  %634 = vmatprep.subr.mxu0 0.0
  %635 = vmatpush1.msra.mxu0 0.0
  %636 = vmatprep.subr.mxu0 0.0
  %637 = vmatpush1.msra.mxu0 0.0
  %638 = vmatprep.subr.mxu0 0.0
  %639 = vmatpush1.msra.mxu0 0.0
  %640 = vmatprep.subr.mxu0 0.0
  %641 = vmatpush1.msra.mxu0 0.0
  %642 = vmatprep.subr.mxu0 0.0
  %643 = vmatpush1.msra.mxu0 0.0
  %644 = vmatprep.subr.mxu0 0.0
  %645 = vmatpush1.msra.mxu0 0.0
  %646 = vmatprep.mubr.f32.mxu0 0.0
  %647 = vmatmul.mubr.f32.gmra.mrb[0].mxu0 %v577
  %v648 = vpop.f32.mrb[0].mxu0
  %v649 = vadd.f32 %v533, %v648
  %v650 = vpop.f32.mrb[0].mxu0
  %651 = vmatprep.mubr.f32.mxu0 0.0
  %652 = vmatmul.mubr.f32.gmra.mrb[0].mxu0 %v580
  %v653 = vpop.f32.mrb[0].mxu0
  %v654 = vadd.f32 %v538, %v653
  %v655 = vpop.f32.mrb[0].mxu0
  %656 = vdwg.mxu0
  %v657 = vld [vmem:[%s7] sm:$0xff]
  %v658 = vld [vmem:[%s7 + $0x8] sm:$0xff]
  %660 = vset.pattern.permute.xlu0 0
  %661 = vperm.xlu0 %660, %v657
  %v662 = vpop.permute.xlu0 %661
  %665 = vset.pattern.permute.xlu0 0
  %666 = vperm.xlu0 %665, %v658
  %v667 = vpop.permute.xlu0 %666
  %v669 = vadd.f32 %v649, %v662
  %v670 = vadd.f32 %v654, %v667
  %v671 = vmul.f32 %v669, 0.5
  %v672 = vmul.f32 %v670, 0.5
  %v673 = vtanh.pop %v671
  %v674 = vtanh.pop %v672
  %v675 = vadd.f32 %v673, 1.0
  %v676 = vadd.f32 %v674, 1.0
  %v677 = vmul.f32 %v671, %v675
  %v678 = vmul.f32 %v672, %v676
  %v679 = vld [vmem:[%s8] sm:$0xff]
  %v680 = vld [vmem:[%s8 + $0x8] sm:$0xff]
  %v681 = vld [vmem:[%s8 + $0x10] sm:$0xff]
  %v682 = vld [vmem:[%s8 + $0x18] sm:$0xff]
  %v684 = vsel %vm575, %v679, 0
  %v687 = vsel %vm575, %v680, 0
  %v690 = vsel %vm575, %v681, 0
  %v693 = vsel %vm575, %v682, 0
  %695 = vmatprep.subr.mxu0 0.0
  %696 = vmatpush1.msra.mxu0 %v677
  %697 = vmatprep.subr.mxu0 0.0
  %698 = vmatpush1.msra.mxu0 %v678
  %699 = vmatprep.subr.mxu0 0.0
  %700 = vmatpush1.msra.mxu0 0.0
  %701 = vmatprep.subr.mxu0 0.0
  %702 = vmatpush1.msra.mxu0 0.0
  %703 = vmatprep.subr.mxu0 0.0
  %704 = vmatpush1.msra.mxu0 0.0
  %705 = vmatprep.subr.mxu0 0.0
  %706 = vmatpush1.msra.mxu0 0.0
  %707 = vmatprep.subr.mxu0 0.0
  %708 = vmatpush1.msra.mxu0 0.0
  %709 = vmatprep.subr.mxu0 0.0
  %710 = vmatpush1.msra.mxu0 0.0
  %711 = vmatprep.subr.mxu0 0.0
  %712 = vmatpush1.msra.mxu0 0.0
  %713 = vmatprep.subr.mxu0 0.0
  %714 = vmatpush1.msra.mxu0 0.0
  %715 = vmatprep.subr.mxu0 0.0
  %716 = vmatpush1.msra.mxu0 0.0
  %717 = vmatprep.subr.mxu0 0.0
  %718 = vmatpush1.msra.mxu0 0.0
  %719 = vmatprep.subr.mxu0 0.0
  %720 = vmatpush1.msra.mxu0 0.0
  %721 = vmatprep.subr.mxu0 0.0
  %722 = vmatpush1.msra.mxu0 0.0
  %723 = vmatprep.subr.mxu0 0.0
  %724 = vmatpush1.msra.mxu0 0.0
  %725 = vmatprep.subr.mxu0 0.0
  %726 = vmatpush1.msra.mxu0 0.0
  %727 = vmatprep.subr.mxu0 0.0
  %728 = vmatpush1.msra.mxu0 0.0
  %729 = vmatprep.subr.mxu0 0.0
  %730 = vmatpush1.msra.mxu0 0.0
  %731 = vmatprep.subr.mxu0 0.0
  %732 = vmatpush1.msra.mxu0 0.0
  %733 = vmatprep.subr.mxu0 0.0
  %734 = vmatpush1.msra.mxu0 0.0
  %735 = vmatprep.subr.mxu0 0.0
  %736 = vmatpush1.msra.mxu0 0.0
  %737 = vmatprep.subr.mxu0 0.0
  %738 = vmatpush1.msra.mxu0 0.0
  %739 = vmatprep.subr.mxu0 0.0
  %740 = vmatpush1.msra.mxu0 0.0
  %741 = vmatprep.subr.mxu0 0.0
  %742 = vmatpush1.msra.mxu0 0.0
  %743 = vmatprep.subr.mxu0 0.0
  %744 = vmatpush1.msra.mxu0 0.0
  %745 = vmatprep.subr.mxu0 0.0
  %746 = vmatpush1.msra.mxu0 0.0
  %747 = vmatprep.subr.mxu0 0.0
  %748 = vmatpush1.msra.mxu0 0.0
  %749 = vmatprep.subr.mxu0 0.0
  %750 = vmatpush1.msra.mxu0 0.0
  %751 = vmatprep.subr.mxu0 0.0
  %752 = vmatpush1.msra.mxu0 0.0
  %753 = vmatprep.subr.mxu0 0.0
  %754 = vmatpush1.msra.mxu0 0.0
  %755 = vmatprep.subr.mxu0 0.0
  %756 = vmatpush1.msra.mxu0 0.0
  %757 = vmatprep.subr.mxu0 0.0
  %758 = vmatpush1.msra.mxu0 0.0
  %759 = vmatprep.mubr.f32.mxu0 0.0
  %760 = vmatmul.mubr.f32.gmra.mrb[0].mxu0 %v684
  %v761 = vpop.f32.mrb[0].mxu0
  %v762 = vadd.f32 0.0, %v761
  %v763 = vpop.f32.mrb[0].mxu0
  %764 = vmatprep.mubr.f32.mxu0 0.0
  %765 = vmatmul.mubr.f32.gmra.mrb[0].mxu0 %v687
  %v766 = vpop.f32.mrb[0].mxu0
  %v767 = vadd.f32 0.0, %v766
  %v768 = vpop.f32.mrb[0].mxu0
  %769 = vmatprep.mubr.f32.mxu0 0.0
  %770 = vmatmul.mubr.f32.gmra.mrb[0].mxu0 %v690
  %v771 = vpop.f32.mrb[0].mxu0
  %v772 = vadd.f32 0.0, %v771
  %v773 = vpop.f32.mrb[0].mxu0
  %774 = vmatprep.mubr.f32.mxu0 0.0
  %775 = vmatmul.mubr.f32.gmra.mrb[0].mxu0 %v693
  %v776 = vpop.f32.mrb[0].mxu0
  %v777 = vadd.f32 0.0, %v776
  %v778 = vpop.f32.mrb[0].mxu0
  %779 = vdwg.mxu0
  %780 = vst [vmem:[%s9] sm:$0xff] %v762
  %781 = vst [vmem:[%s9 + $0x8] sm:$0xff] %v767
  %782 = vst [vmem:[%s9 + $0x10] sm:$0xff] %v772
  %783 = vst [vmem:[%s9 + $0x18] sm:$0xff] %v777
  // Predicated region
  $region38: #{cnn_model_forward.1} parent=0 // pred_check
    _
  $region39: #{cnn_model_forward.1} parent=0 // pred_check_branch
    %785 = sbr.rel (0) target = $region41
  $region40: #{cnn_model_forward.1} parent=0 // pred_region
    _
  $region41: #{cnn_model_forward.1} parent=0 // pred_fallthru
    _
  // Predicated region
  $region42: #{cnn_model_forward.1} parent=0 // pred_check
    _
  $region43: #{cnn_model_forward.1} parent=0 // pred_check_branch
    %787 = sbr.rel (0) target = $region45
  $region44: #{cnn_model_forward.1} parent=0 // pred_region
    _
  $region45: #{cnn_model_forward.1} parent=0 // pred_fallthru
    _

</llo_original>
